<compile_context>
chip_gen: v6e
topology: v6e:2x2x1
jax: 0.10.0
libtpu: 0.0.40
codegen_flags: <defaults>
</compile_context>

<pallas_src>
import functools
from typing import Any, NamedTuple

import numpy as np
import jax
import jax.numpy as jnp
from jax import lax
from jax.experimental import pallas as pl
from jax.experimental.pallas import tpu as pltpu


# --------------------------------------------------------------------------
# Small host-side helpers.
# --------------------------------------------------------------------------
def _round_up(x, m):
    return ((x + m - 1) // m) * m


def _cdiv(a, b):
    return -(-a // b)


def _next_pow2(x):
    x = int(x)
    return 1 if x <= 1 else 1 << (x - 1).bit_length()


def _vmem_capacity_bytes():
    """Physical VMEM of the attached TPU (128 MiB v5e/v6e, 64 MiB v7x)."""
    try:
        return int(pltpu.get_tpu_info().vmem_capacity_bytes)
    except Exception:
        return 64 * 1024 * 1024          # conservative fallback (v7x-sized)


# --------------------------------------------------------------------------
# Pallas kernel: contrastive ROI loss between source and target crop sets.
# Grid = (Ns row-blocks ["parallel"], feature chunks ["arbitrary"]).
# Scalar prefetch: dims = [ns, nt] (true, unpadded row counts) in SMEM.
# --------------------------------------------------------------------------
def _contrastive_kernel(dims_ref, s_ref, t_ref, out_ref,
                        st_acc, s2_acc, t2_acc, *, margin, row_blk):
    i = pl.program_id(0)                 # Ns row block (parallel)
    k = pl.program_id(1)                 # feature chunk (reduction)
    ns = dims_ref[0]
    nt = dims_ref[1]

    @pl.when(k == 0)
    def _init():
        st_acc[...] = jnp.zeros_like(st_acc)
        s2_acc[...] = jnp.zeros_like(s2_acc)
        # Padded / invalid target rows start at +1e30 so they drop out of the
        # min and the hinge with no (row_blk, nt_p) mask in the epilogue.
        trow = lax.broadcasted_iota(jnp.int32, t2_acc.shape, 0)
        t2_acc[...] = jnp.where(trow < nt, jnp.float32(0.0), jnp.float32(1e30))

    s = s_ref[...]                       # (row_blk, tk) compute dtype
    t = t_ref[...]                       # (nt_p,   tk) compute dtype

    # Per-chunk squared norms, accumulated in f32.
    # TODO(synk): if a bundle dump shows VALU/XLU as the binding slot (v5e has
    # no bf16 VPU path), fold these into a single Gram matmul on the idle MXU.
    sf = s.astype(jnp.float32)
    tf = t.astype(jnp.float32)
    s2_acc[...] += jnp.sum(sf * sf, axis=1, keepdims=True)      # (row_blk, 1)
    t2_acc[...] += jnp.sum(tf * tf, axis=1, keepdims=True)      # (nt_p, 1)

    # Transposed-RHS MXU matmul (contract dim 1 vs dim 1, no explicit
    # transpose / re-layout of the (nt_p, tk) tile), f32 accumulation.
    st_acc[...] += lax.dot_general(
        s, t, (((1,), (1,)), ((), ())), preferred_element_type=jnp.float32)

    @pl.when(k == pl.num_programs(1) - 1)
    def _finalize():
        st = st_acc[...]                                 # (row_blk, nt_p)
        s2 = s2_acc[...]                                 # (row_blk, 1)
        t2 = t2_acc[...]                                 # (nt_p, 1)

        d2 = jnp.maximum(s2 + jnp.transpose(t2) - 2.0 * st, 0.0)
        d = jnp.sqrt(d2)                                 # padded cols ~ 1e15

        # lh = nearest-target distance per source crop.
        lh = jnp.min(d, axis=1, keepdims=True)           # (row_blk, 1)
        # rh = hinge over distances NOT equal to the min (tie exclusion,
        # matching `norms[norms != lh]` in the reference).
        hinge = jnp.maximum(0.0, margin - d)
        rh = jnp.sum(jnp.where(d != lh, hinge, 0.0), axis=1, keepdims=True)

        # Padded source rows of this row block contribute nothing.
        row = lax.broadcasted_iota(jnp.int32, lh.shape, 0) + i * row_blk
        per_row = jnp.where(row < ns, lh + rh, 0.0)
        out_ref[0] = jnp.sum(per_row, keepdims=True)      # partial sum, (1, 1)


# --------------------------------------------------------------------------
# Kernel planning (VMEM-aware tiling) and the fused per-level jit.
# --------------------------------------------------------------------------
class _LevelCfg(NamedTuple):
    newsize: int
    f: int
    f_pad: int
    tk: int
    k_steps: int
    nt_p: int
    row_blk: int
    nb: int
    margin: float
    vmem_limit: int
    compute_dtype: Any


def _plan_kernel(ns_p, nt_p, f, itemsize):
    """Pick row-block / contraction-chunk sizes from the real VMEM capacity."""
    # Row-block Ns: bounds the (row_blk, nt_p) accumulator + epilogue temps
    # (v7x has only 64 MiB VMEM) and gives v7x's second TensorCore a
    # "parallel" grid axis to pick up.
    row_blk = min(ns_p, 256)
    nb = ns_p // row_blk

    cap = _vmem_capacity_bytes()
    vmem_limit = max(32 << 20, min((cap * 3) // 4, 96 << 20))

    # Reserve the f32 accumulator plus ~5 live epilogue temporaries and slack.
    reserve = 6 * row_blk * nt_p * 4 + 8 * (row_blk + nt_p) + (2 << 20)
    input_budget = max(vmem_limit - reserve, 4 << 20)

    # Double-buffered (row_blk, tk) + (nt_p, tk) input tiles.
    tk_cap = input_budget // (2 * 2 * (row_blk + nt_p) * itemsize)
    tk_cap = max(128, (tk_cap // 128) * 128)

    f_pad128 = _round_up(f, 128)
    # >= 2 chunks (so the next chunk's DMA hides this chunk's compute), but as
    # few chunks as VMEM allows so the fixed per-step cost amortizes.
    k_steps = max(2, _cdiv(f_pad128, tk_cap))
    k_steps = min(k_steps, max(1, f_pad128 // 128))
    tk = _round_up(_cdiv(f_pad128, k_steps), 128)
    k_steps = _cdiv(f_pad128, tk)
    f_pad = tk * k_steps
    return row_blk, nb, tk, k_steps, f_pad, vmem_limit


def _crop_resize_one(fmap, box, newsize):
    """Bilinear crop+resize of one box. fmap: (C,H,W); box: (4,) [t,l,b,r]."""
    C, H, W = fmap.shape
    tf_ = jnp.floor(box[0])
    lf_ = jnp.floor(box[1])
    bf_ = jnp.floor(box[2])
    rf_ = jnp.floor(box[3])
    h = bf_ - tf_
    w = rf_ - lf_
    h = jnp.where(h == 0, 1.0, h)
    w = jnp.where(w == 0, 1.0, w)

    # TODO(synk): torchvision F.resized_crop(antialias=True) low-pass filters
    # when downscaling; plain bilinear sampling used here (glue).
    ys = (jnp.arange(newsize, dtype=jnp.float32) + 0.5) * (h / newsize) - 0.5
    xs = (jnp.arange(newsize, dtype=jnp.float32) + 0.5) * (w / newsize) - 0.5
    ys = jnp.clip(ys, 0.0, h - 1.0) + tf_
    xs = jnp.clip(xs, 0.0, w - 1.0) + lf_
    ys = jnp.clip(ys, 0.0, H - 1.0)
    xs = jnp.clip(xs, 0.0, W - 1.0)

    y0 = jnp.floor(ys)
    x0 = jnp.floor(xs)
    wy = (ys - y0)[:, None]
    wx = (xs - x0)[None, :]
    y0i = y0.astype(jnp.int32)
    x0i = x0.astype(jnp.int32)
    y1i = jnp.minimum(y0i + 1, H - 1)
    x1i = jnp.minimum(x0i + 1, W - 1)

    fy0 = fmap[:, y0i, :]
    fy1 = fmap[:, y1i, :]
    f00 = fy0[:, :, x0i]
    f01 = fy0[:, :, x1i]
    f10 = fy1[:, :, x0i]
    f11 = fy1[:, :, x1i]

    top = f00 * (1.0 - wx) + f01 * wx
    bot = f10 * (1.0 - wx) + f11 * wx
    return top * (1.0 - wy) + bot * wy


@functools.partial(jax.jit, static_argnames=("cfg",))
def _level_loss_jit(fmap, flat_boxes, img_idx, src_rows, tgt_rows, ns_nt, *, cfg):
    """Fused: crop all boxes -> compute-dtype pack -> Pallas contrastive loss."""
    # One vmapped bilinear crop-resize over every box of every image.
    crops = jax.vmap(lambda b, ii: _crop_resize_one(fmap[ii], b, cfg.newsize))(
        flat_boxes, img_idx)                                    # (n_cap, C, S, S)
    flat = crops.reshape(crops.shape[0], -1).astype(cfg.compute_dtype)

    pad_f = cfg.f_pad - cfg.f
    s_pad = jnp.pad(flat[src_rows], ((0, 0), (0, pad_f)))       # (nb*row_blk, f_pad)
    t_pad = jnp.pad(flat[tgt_rows], ((0, 0), (0, pad_f)))       # (nt_p,       f_pad)

    kernel = functools.partial(_contrastive_kernel, margin=cfg.margin,
                               row_blk=cfg.row_blk)
    out = pl.pallas_call(
        kernel,
        out_shape=jax.ShapeDtypeStruct((cfg.nb, 1, 1), jnp.float32),
        grid_spec=pltpu.PrefetchScalarGridSpec(
            num_scalar_prefetch=1,                               # ns_nt -> SMEM
            grid=(cfg.nb, cfg.k_steps),
            in_specs=[
                pl.BlockSpec((cfg.row_blk, cfg.tk), lambda i, k, dims: (i, k)),
                pl.BlockSpec((cfg.nt_p, cfg.tk), lambda i, k, dims: (0, k)),
            ],
            out_specs=pl.BlockSpec((1, 1, 1), lambda i, k, dims: (i, 0, 0)),
            scratch_shapes=[
                pltpu.VMEM((cfg.row_blk, cfg.nt_p), jnp.float32),  # s . t^T
                pltpu.VMEM((cfg.row_blk, 1), jnp.float32),         # ||s||^2
                pltpu.VMEM((cfg.nt_p, 1), jnp.float32),            # ||t||^2
            ],
        ),
        compiler_params=pltpu.CompilerParams(
            dimension_semantics=("parallel", "arbitrary"),
            vmem_limit_bytes=cfg.vmem_limit,
        ),
    )(ns_nt, s_pad, t_pad)
    # Sum the per-row-block partial losses.
    return jnp.sum(out).reshape(1)


# --------------------------------------------------------------------------
# Plain-JAX / numpy glue (box bookkeeping) + per-level driver.
# --------------------------------------------------------------------------
def scale_boxes(img_size, boxes, feat_size):
    # Simplified ratio rescale of (t, l, b, r) boxes from image coords to
    # feature-map coords (ultralytics.ops.scale_boxes also handles letterbox
    # padding, which does not apply here).
    gh = feat_size[0] / img_size[0]
    gw = feat_size[1] / img_size[1]
    scale = np.array([gh, gw, gh, gw], dtype=np.float32)
    out = np.asarray(boxes, dtype=np.float32) * scale
    out[:, 0::2] = np.clip(out[:, 0::2], 0.0, feat_size[0])
    out[:, 1::2] = np.clip(out[:, 1::2], 0.0, feat_size[1])
    return out


def calc_average_box_size_batch(batch_boxes):
    tops, lefts, bots, rights = [], [], [], []
    for box in [b for b in batch_boxes if b.shape[0] != 0]:
        tops.append(float(np.mean(box[:, 0])))
        lefts.append(float(np.mean(box[:, 1])))
        bots.append(float(np.mean(box[:, 2])))
        rights.append(float(np.mean(box[:, 3])))
    if not tops:
        return None
    h = int(np.mean(bots) - np.mean(tops))
    w = int(np.mean(rights) - np.mean(lefts))
    return max(h, w)


def _per_level_loss(fmap, boxes, img_size, source_idxs, target_idxs,
                    margin=1.0, compute_dtype=jnp.bfloat16):
    """One feature level: scale boxes, crop, contrastive loss (Pallas)."""
    zero = jnp.zeros((1,), jnp.float32)
    fsize = (int(fmap.shape[-2]), int(fmap.shape[-1]))
    fboxes = [scale_boxes(img_size, np.array(b, dtype=np.float32, copy=True),
                          fsize) for b in boxes]
    newsize = calc_average_box_size_batch(fboxes)
    if not newsize:          # None or 0 -> no crops for this level (matches ref)
        return zero

    # Flatten all boxes of all images into one list (images with zero boxes
    # simply contribute no rows, matching the reference's torch.cat behavior).
    counts = [int(b.shape[0]) for b in fboxes]
    starts = np.concatenate([[0], np.cumsum(counts)])[:-1].astype(np.int64)
    n_total = int(np.sum(counts))
    src_rows = [r for i in source_idxs
                for r in range(int(starts[i]), int(starts[i]) + counts[i])]
    tgt_rows = [r for j in target_idxs
                for r in range(int(starts[j]), int(starts[j]) + counts[j])]
    ns, nt = len(src_rows), len(tgt_rows)
    if ns == 0 or nt == 0:
        return zero

    # Bucketed padded sizes -> stable kernel shapes across training steps; the
    # true ns/nt go into the kernel as SMEM scalars.
    # TODO(synk): bucketing `newsize` as well would remove the remaining
    # recompile source but changes the crop resolution vs. the reference.
    ns_p = max(8, _next_pow2(ns))
    nt_p = max(8, _next_pow2(nt))
    n_cap = max(1, _next_pow2(n_total))

    flat_boxes = np.zeros((n_cap, 4), np.float32)
    img_idx = np.zeros((n_cap,), np.int32)
    r = 0
    for i, fb in enumerate(fboxes):
        for j in range(fb.shape[0]):
            flat_boxes[r] = fb[j]
            img_idx[r] = i
            r += 1
    if n_total < n_cap:                       # pad rows are masked in-kernel
        flat_boxes[n_total:] = flat_boxes[0]
        img_idx[n_total:] = img_idx[0]

    src_rows_p = np.zeros((ns_p,), np.int32)
    src_rows_p[:ns] = np.asarray(src_rows, np.int32)
    tgt_rows_p = np.zeros((nt_p,), np.int32)
    tgt_rows_p[:nt] = np.asarray(tgt_rows, np.int32)

    C = int(fmap.shape[1])
    f = C * int(newsize) * int(newsize)
    itemsize = jnp.dtype(compute_dtype).itemsize
    row_blk, nb, tk, k_steps, f_pad, vmem_limit = _plan_kernel(
        ns_p, nt_p, f, itemsize)

    cfg = _LevelCfg(newsize=int(newsize), f=f, f_pad=f_pad, tk=tk,
                    k_steps=k_steps, nt_p=nt_p, row_blk=row_blk, nb=nb,
                    margin=float(margin), vmem_limit=int(vmem_limit),
                    compute_dtype=compute_dtype)

    ns_nt = jnp.array([ns, nt], jnp.int32)
    return _level_loss_jit(fmap, jnp.asarray(flat_boxes), jnp.asarray(img_idx),
                           jnp.asarray(src_rows_p), jnp.asarray(tgt_rows_p),
                           ns_nt, cfg=cfg)


# --------------------------------------------------------------------------
# ROILoss forward (loss_type='contr' path).
# --------------------------------------------------------------------------
def roi_loss_forward(lf, mf, sf, boxes, img_size, da_labels, margin=1.0,
                     compute_dtype=jnp.bfloat16):
    """
    lf/mf/sf: NCHW feature maps (jnp arrays).
    boxes:    list (len = batch) of (Ni, 4) numpy boxes (t, l, b, r) in image
              coordinates.
              # TODO(synk): ops.non_max_suppression(da_preds) has no Pallas
              # equivalent (data-dependent NMS); boxes are supplied directly.
    da_labels: (B,) 0 = source domain, 1 = target domain.
    compute_dtype: bf16 halves kernel HBM traffic; pass jnp.float32 to track
              the reference more closely for near-duplicate crops.
    """
    labels = np.asarray(da_labels)
    source_idxs = np.nonzero(labels == 0)[0]
    target_idxs = np.nonzero(labels == 1)[0]

    zero = jnp.zeros((1,), jnp.float32)
    if sum(int(b.shape[0]) for b in boxes) == 0:
        return zero, zero, zero

    # TODO(synk): self.tk path (TopKRank) and loss_type='disc' (sklearn
    # AgglomerativeClustering + channel_disc + BCEWithLogits) have no clean
    # Pallas equivalent; only the contrastive path is implemented.

    # Three levels issued back-to-back (async dispatch, no host sync between);
    # each level is a single fused jit: crop -> pack -> Pallas kernel.
    Dlf = _per_level_loss(lf, boxes, img_size, source_idxs, target_idxs,
                          margin, compute_dtype)
    Dmf = _per_level_loss(mf, boxes, img_size, source_idxs, target_idxs,
                          margin, compute_dtype)
    Dsf = _per_level_loss(sf, boxes, img_size, source_idxs, target_idxs,
                          margin, compute_dtype)
    return Dlf, Dmf, Dsf


# --------------------------------------------------------------------------
if __name__ == "__main__":
    key = jax.random.PRNGKey(0)
    k1, k2, k3 = jax.random.split(key, 3)

    B = 2                      # one source-domain image, one target-domain image
    img_h, img_w = 64, 64
    lfc, mfc, sfc = 8, 16, 32  # small stand-ins for the default 64/128/256 channels

    lf = jax.random.normal(k1, (B, lfc, 16, 16), jnp.float32)
    mf = jax.random.normal(k2, (B, mfc, 8, 8), jnp.float32)
    sf = jax.random.normal(k3, (B, sfc, 4, 4), jnp.float32)

    da_labels = np.array([0, 1], dtype=np.int32)

    # Deterministic boxes (t, l, b, r) in image coords (stand-in for NMS output).
    boxes = [
        np.array([[4.0, 4.0, 36.0, 36.0],
                  [10.0, 8.0, 50.0, 44.0]], dtype=np.float32),
        np.array([[0.0, 0.0, 32.0, 32.0],
                  [20.0, 16.0, 60.0, 56.0]], dtype=np.float32),
    ]

    Dlf, Dmf, Dsf = roi_loss_forward(lf, mf, sf, boxes, (img_h, img_w), da_labels)
    jax.block_until_ready((Dlf, Dmf, Dsf))
    ok = all(np.isfinite(np.asarray(x)).all() for x in (Dlf, Dmf, Dsf))
    if ok:
        print("KERNEL_OK")
    else:
        print("KERNEL_FAILED: non-finite loss", Dlf, Dmf, Dsf)
</pallas_src>

<mosaic_0001>
module attributes {stable_mosaic.version = 11 : i64} {
  func.func @_contrastive_kernel(%arg0: i32, %arg1: i32, %arg2: memref<2xi32, #tpu.memory_space<smem>>, %arg3: memref<8x384xbf16, #tpu.memory_space<vmem>>, %arg4: memref<8x384xbf16, #tpu.memory_space<vmem>>, %arg5: memref<1x1x1xf32, #tpu.memory_space<vmem>>, %arg6: memref<8x8xf32, #tpu.memory_space<vmem>>, %arg7: memref<8x1xf32, #tpu.memory_space<vmem>>, %arg8: memref<8x1xf32, #tpu.memory_space<vmem>>) attributes {dimension_semantics = [#tpu.dimension_semantics<parallel>, #tpu.dimension_semantics<arbitrary>], iteration_bounds = array<i64: 1, 2>, scalar_prefetch = 1 : i64, scratch_operands = 3 : i64, tpu.core_type = #tpu.core_type<tc>, window_params = [{transform_indices = @transform_0, window_bounds = array<i64: 8, 384>}, {transform_indices = @transform_1, window_bounds = array<i64: 8, 384>}, {transform_indices = @transform_2, window_bounds = array<i64: 1, 1, 1>}]} {
    %c0 = arith.constant 0 : index
    %0 = memref.load %arg2[%c0] : memref<2xi32, #tpu.memory_space<smem>>
    %c1 = arith.constant 1 : index
    %1 = memref.load %arg2[%c1] : memref<2xi32, #tpu.memory_space<smem>>
    %c0_i32 = arith.constant 0 : i32
    %2 = arith.cmpi eq, %arg1, %c0_i32 : i32
    %3 = arith.extui %2 : i1 to i32
    %c0_i32_0 = arith.constant 0 : i32
    %4 = arith.cmpi ne, %3, %c0_i32_0 : i32
    scf.if %4 {
      %cst_20 = arith.constant 0.000000e+00 : f32
      %28 = vector.broadcast %cst_20 : f32 to vector<8x8xf32>
      %c0_21 = arith.constant 0 : index
      %c0_22 = arith.constant 0 : index
      %29 = vector.load %arg6[%c0_21, %c0_22] : memref<8x8xf32, #tpu.memory_space<vmem>>, vector<8x8xf32>
      tpu.vector_store %arg6[%c0_21, %c0_22], %28 {strides = array<i32>} : memref<8x8xf32, #tpu.memory_space<vmem>>, vector<8x8xf32>,
      %cst_23 = arith.constant 0.000000e+00 : f32
      %30 = vector.broadcast %cst_23 : f32 to vector<8x1xf32>
      %c0_24 = arith.constant 0 : index
      %c0_25 = arith.constant 0 : index
      %31 = vector.load %arg7[%c0_24, %c0_25] : memref<8x1xf32, #tpu.memory_space<vmem>>, vector<8x1xf32>
      tpu.vector_store %arg7[%c0_24, %c0_25], %30 {strides = array<i32>} : memref<8x1xf32, #tpu.memory_space<vmem>>, vector<8x1xf32>,
      %32 = tpu.iota {dimensions = array<i32: 0>} : vector<8x1xi32>
      %33 = vector.broadcast %1 : i32 to vector<8x1xi32>
      %34 = arith.cmpi slt, %32, %33 : vector<8x1xi32>
      %cst_26 = arith.constant 0.000000e+00 : f32
      %cst_27 = arith.constant 1.000000e+30 : f32
      %35 = vector.broadcast %cst_26 : f32 to vector<8x1xf32>
      %36 = vector.broadcast %cst_27 : f32 to vector<8x1xf32>
      %37 = arith.select %34, %35, %36 : vector<8x1xi1>, vector<8x1xf32>
      %c0_28 = arith.constant 0 : index
      %c0_29 = arith.constant 0 : index
      %38 = vector.load %arg8[%c0_28, %c0_29] : memref<8x1xf32, #tpu.memory_space<vmem>>, vector<8x1xf32>
      tpu.vector_store %arg8[%c0_28, %c0_29], %37 {strides = array<i32>} : memref<8x1xf32, #tpu.memory_space<vmem>>, vector<8x1xf32>,
    } else {
    }
    %c0_1 = arith.constant 0 : index
    %c0_2 = arith.constant 0 : index
    %5 = vector.load %arg3[%c0_1, %c0_2] : memref<8x384xbf16, #tpu.memory_space<vmem>>, vector<8x384xbf16>
    %c0_3 = arith.constant 0 : index
    %c0_4 = arith.constant 0 : index
    %6 = vector.load %arg4[%c0_3, %c0_4] : memref<8x384xbf16, #tpu.memory_space<vmem>>, vector<8x384xbf16>
    %7 = arith.extf %5 : vector<8x384xbf16> to vector<8x384xf32>
    %8 = arith.extf %6 : vector<8x384xbf16> to vector<8x384xf32>
    %c0_5 = arith.constant 0 : index
    %c0_6 = arith.constant 0 : index
    %9 = vector.load %arg7[%c0_5, %c0_6] : memref<8x1xf32, #tpu.memory_space<vmem>>, vector<8x1xf32>
    %10 = arith.mulf %7, %7 : vector<8x384xf32>
    %cst = arith.constant dense<0.000000e+00> : vector<8xf32>
    %11 = vector.multi_reduction <add>, %10, %cst [1] : vector<8x384xf32> to vector<8xf32>
    %12 = vector.shape_cast %11 : vector<8xf32> to vector<8x1xf32>
    %13 = arith.addf %9, %12 : vector<8x1xf32>
    %c0_7 = arith.constant 0 : index
    %c0_8 = arith.constant 0 : index
    %14 = vector.load %arg7[%c0_7, %c0_8] : memref<8x1xf32, #tpu.memory_space<vmem>>, vector<8x1xf32>
    tpu.vector_store %arg7[%c0_7, %c0_8], %13 {strides = array<i32>} : memref<8x1xf32, #tpu.memory_space<vmem>>, vector<8x1xf32>,
    %c0_9 = arith.constant 0 : index
    %c0_10 = arith.constant 0 : index
    %15 = vector.load %arg8[%c0_9, %c0_10] : memref<8x1xf32, #tpu.memory_space<vmem>>, vector<8x1xf32>
    %16 = arith.mulf %8, %8 : vector<8x384xf32>
    %cst_11 = arith.constant dense<0.000000e+00> : vector<8xf32>
    %17 = vector.multi_reduction <add>, %16, %cst_11 [1] : vector<8x384xf32> to vector<8xf32>
    %18 = vector.shape_cast %17 : vector<8xf32> to vector<8x1xf32>
    %19 = arith.addf %15, %18 : vector<8x1xf32>
    %c0_12 = arith.constant 0 : index
    %c0_13 = arith.constant 0 : index
    %20 = vector.load %arg8[%c0_12, %c0_13] : memref<8x1xf32, #tpu.memory_space<vmem>>, vector<8x1xf32>
    tpu.vector_store %arg8[%c0_12, %c0_13], %19 {strides = array<i32>} : memref<8x1xf32, #tpu.memory_space<vmem>>, vector<8x1xf32>,
    %c0_14 = arith.constant 0 : index
    %c0_15 = arith.constant 0 : index
    %21 = vector.load %arg6[%c0_14, %c0_15] : memref<8x8xf32, #tpu.memory_space<vmem>>, vector<8x8xf32>
    %cst_16 = arith.constant dense<0.000000e+00> : vector<8x8xf32>
    %22 = tpu.matmul %5, %6, %cst_16 {dimension_numbers = #tpu.dot_dimension_numbers<[1], [1], [0], [0], [0, 0, 1, 0], [], []>} : vector<8x384xbf16>, vector<8x384xbf16>, vector<8x8xf32> -> vector<8x8xf32>
    %23 = arith.addf %21, %22 : vector<8x8xf32>
    %c0_17 = arith.constant 0 : index
    %c0_18 = arith.constant 0 : index
    %24 = vector.load %arg6[%c0_17, %c0_18] : memref<8x8xf32, #tpu.memory_space<vmem>>, vector<8x8xf32>
    tpu.vector_store %arg6[%c0_17, %c0_18], %23 {strides = array<i32>} : memref<8x8xf32, #tpu.memory_space<vmem>>, vector<8x8xf32>,
    %c1_i32 = arith.constant 1 : i32
    %25 = arith.cmpi eq, %arg1, %c1_i32 : i32
    %26 = arith.extui %25 : i1 to i32
    %c0_i32_19 = arith.constant 0 : i32
    %27 = arith.cmpi ne, %26, %c0_i32_19 : i32
    scf.if %27 {
      %c0_20 = arith.constant 0 : index
      %c0_21 = arith.constant 0 : index
      %28 = vector.load %arg6[%c0_20, %c0_21] : memref<8x8xf32, #tpu.memory_space<vmem>>, vector<8x8xf32>
      %c0_22 = arith.constant 0 : index
      %c0_23 = arith.constant 0 : index
      %29 = vector.load %arg7[%c0_22, %c0_23] : memref<8x1xf32, #tpu.memory_space<vmem>>, vector<8x1xf32>
      %c0_24 = arith.constant 0 : index
      %c0_25 = arith.constant 0 : index
      %30 = vector.load %arg8[%c0_24, %c0_25] : memref<8x1xf32, #tpu.memory_space<vmem>>, vector<8x1xf32>
      %31 = tpu.transpose %30, [1, 0] : vector<8x1xf32> -> vector<1x8xf32>
      %32 = vector.broadcast %29 : vector<8x1xf32> to vector<8x8xf32>
      %33 = vector.broadcast %31 : vector<1x8xf32> to vector<8x8xf32>
      %34 = arith.addf %32, %33 : vector<8x8xf32>
      %cst_26 = arith.constant 2.000000e+00 : f32
      %35 = vector.broadcast %cst_26 : f32 to vector<8x8xf32>
      %36 = arith.mulf %35, %28 : vector<8x8xf32>
      %37 = arith.subf %34, %36 : vector<8x8xf32>
      %cst_27 = arith.constant 0.000000e+00 : f32
      %38 = vector.broadcast %cst_27 : f32 to vector<8x8xf32>
      %39 = arith.maximumf %37, %38 : vector<8x8xf32>
      %40 = math.sqrt %39 : vector<8x8xf32>
      %cst_28 = arith.constant dense<0x7F800000> : vector<8xf32>
      %41 = vector.multi_reduction <minimumf>, %40, %cst_28 [1] : vector<8x8xf32> to vector<8xf32>
      %42 = vector.shape_cast %41 : vector<8xf32> to vector<8x1xf32>
      %cst_29 = arith.constant 1.000000e+00 : f32
      %43 = vector.broadcast %cst_29 : f32 to vector<8x8xf32>
      %44 = arith.subf %43, %40 : vector<8x8xf32>
      %cst_30 = arith.constant 0.000000e+00 : f32
      %45 = vector.broadcast %cst_30 : f32 to vector<8x8xf32>
      %46 = arith.maximumf %45, %44 : vector<8x8xf32>
      %47 = vector.broadcast %42 : vector<8x1xf32> to vector<8x8xf32>
      %48 = arith.cmpf one, %40, %47 : vector<8x8xf32>
      %cst_31 = arith.constant 0.000000e+00 : f32
      %49 = vector.broadcast %cst_31 : f32 to vector<8x8xf32>
      %50 = arith.select %48, %46, %49 : vector<8x8xi1>, vector<8x8xf32>
      %cst_32 = arith.constant dense<0.000000e+00> : vector<8xf32>
      %51 = vector.multi_reduction <add>, %50, %cst_32 [1] : vector<8x8xf32> to vector<8xf32>
      %52 = vector.shape_cast %51 : vector<8xf32> to vector<8x1xf32>
      %53 = tpu.iota {dimensions = array<i32: 0>} : vector<8x1xi32>
      %c8_i32 = arith.constant 8 : i32
      %54 = arith.muli %arg0, %c8_i32 : i32
      %55 = vector.broadcast %54 : i32 to vector<8x1xi32>
      %56 = arith.addi %53, %55 : vector<8x1xi32>
      %57 = vector.broadcast %0 : i32 to vector<8x1xi32>
      %58 = arith.cmpi slt, %56, %57 : vector<8x1xi32>
      %59 = arith.addf %42, %52 : vector<8x1xf32>
      %cst_33 = arith.constant 0.000000e+00 : f32
      %60 = vector.broadcast %cst_33 : f32 to vector<8x1xf32>
      %61 = arith.select %58, %59, %60 : vector<8x1xi1>, vector<8x1xf32>
      %62 = vector.shape_cast %61 : vector<8x1xf32> to vector<1x8x1xf32>
      %cst_34 = arith.constant dense<0.000000e+00> : vector<1xf32>
      %63 = vector.multi_reduction <add>, %62, %cst_34 [1, 2] : vector<1x8x1xf32> to vector<1xf32>
      %64 = vector.shape_cast %63 : vector<1xf32> to vector<1x1x1xf32>
      %65 = vector.extract %64[0, 0, 0] : f32 from vector<1x1x1xf32>
      %66 = vector.broadcast %65 : f32 to vector<1x1xf32>
      %c0_35 = arith.constant 0 : index
      %c0_36 = arith.constant 0 : index
      %c0_37 = arith.constant 0 : index
      %67 = vector.load %arg5[%c0_35, %c0_36, %c0_37] : memref<1x1x1xf32, #tpu.memory_space<vmem>>, vector<1x1x1xf32>
      %68 = vector.shape_cast %67 : vector<1x1x1xf32> to vector<1x1xf32>
      %69 = vector.shape_cast %66 : vector<1x1xf32> to vector<1x1x1xf32>
      tpu.vector_store %arg5[%c0_35, %c0_36, %c0_37], %69 {strides = array<i32>} : memref<1x1x1xf32, #tpu.memory_space<vmem>>, vector<1x1x1xf32>,
    } else {
    }
    return
  }
  func.func @transform_0(%arg0: i32, %arg1: i32, %arg2: memref<2xi32, #tpu.memory_space<smem>>) -> (i32, i32) {
    %c0_i32 = arith.constant 0 : i32
    return %arg0, %arg1 : i32, i32
  }
  func.func @transform_1(%arg0: i32, %arg1: i32, %arg2: memref<2xi32, #tpu.memory_space<smem>>) -> (i32, i32) {
    %c0_i32 = arith.constant 0 : i32
    %c0_i32_0 = arith.constant 0 : i32
    return %c0_i32, %arg1 : i32, i32
  }
  func.func @transform_2(%arg0: i32, %arg1: i32, %arg2: memref<2xi32, #tpu.memory_space<smem>>) -> (i32, i32, i32) {
    %c0_i32 = arith.constant 0 : i32
    %c0_i32_0 = arith.constant 0 : i32
    %c0_i32_1 = arith.constant 0 : i32
    return %arg0, %c0_i32, %c0_i32_0 : i32, i32, i32
  }
}

</mosaic_0001>

<llo_original>
// kernel: _level_loss_jit.1
$region0: #{_level_loss_jit.1}
  #allocation0 [shape = 'u32[]', space=smem, size = 0x4, offset = 0x4, fixed_abs, tag = 'smem constant byte address 0x4 - core index']
  #allocation1 [shape = 'u32[144,128]{1,0:T(1,128)}', space=vmem, size = 0x12000, scoped, tag = 'internal scratch']
  #allocation2 [shape = 'f32[8,8]{1,0:T(8,128)}', space=vmem, size = 0x1000, scoped, tag = 'scratch operand']
  #allocation3 [shape = 'f32[8,1]{1,0:T(8,128)}', space=vmem, size = 0x1000, scoped, tag = 'scratch operand']
  #allocation4 [shape = 'f32[8,1]{1,0:T(8,128)}', space=vmem, size = 0x1000, scoped, tag = 'scratch operand']
  #allocation5 [shape = 's32[1]{0}', space=sflag, size = 0x4, scoped, tag = 'scoped memory for _level_loss_jit.1']
  #allocation6 [shape = 'u8[512]{0}', space=smem, size = 0x200, scoped, tag = 'prefetched SMEM operand 0']
  %s0 = inlined_call_operand.vmem [shape: s32[2], index: 0, kind: input, shape index: {}]
  %s1 = inlined_call_operand.vmem [shape: bf16[8,768], index: 1, kind: input, shape index: {}]
  %s2 = inlined_call_operand.vmem [shape: bf16[8,768], index: 2, kind: input, shape index: {}]
  %s3 = inlined_call_operand.hbm [shape: f32[1,1,1], index: 3, kind: output, shape index: {}]
  %s4 = sld [smem:[#allocation0]]
  $region49: #{_level_loss_jit.1} parent=0
    _
  %s6 = ssub.s32 1, %s4
  %s7 = scalar_select 0, %s6, %s4
  %s8 = sshll.u32 %s0, 4
  %s9 = int_to_ptr.vmem [resolvable:$true] %s8
  %11 = dma.vmem_to_smem %s9, 16, [#allocation6], [#allocation5]
  %12 = dma.done [#allocation5], 16
  %13 = sfence
  $region1: #{_level_loss_jit.1} parent=0
    #allocation7 [shape = 'u8[512]{0}', space=vmem, size = 0x400, scoped, tag = 'output window, operand 0, single buffered']
    #allocation8 [shape = 's32[2]{0}', space=sflag, size = 0x8, scoped, tag = 'scoped memory for _level_loss_jit.1']
    %14 = vsyncpa [#allocation8], 0
    loop: start=0, step=1, limit=4
    $region2: #{_level_loss_jit.1} parent=1 // loop_pre_header
      _
    $region3: #{_level_loss_jit.1} parent=1 // loop_header
      %s16 = sphi 0, %s20
      %p17 = scmp.ge.s32.totalorder %s16, 4
      %s23 = sphi 0, %s35
      %s24 = sphi 0, %s31
      %s25 = sphi 0, %s23
      %s26 = sphi 0, %s24
      %s27 = sphi 0, %s25
      %s28 = sphi 0, %s26
      %s40 = sphi 0, %s42
      %s43 = sphi 0, %s40
      %s44 = sphi 0, %s43
      %s60 = sphi 0, %s44
      %s66 = sphi 0, %s68
      %s69 = sphi 0, %s66
      %s70 = sphi 0, %s69
      %s86 = sphi 0, %s70
      %s92 = sphi 0, %s94
      %s95 = sphi 0, %s92
      %s96 = sphi 0, %s95
      %s112 = sphi 0, %s96
    $region4: #{_level_loss_jit.1} parent=1 // loop_header_branch
      %19 = sbr.rel (%p17) target = $region8
    $region5: #{_level_loss_jit.1} parent=1 // loop_body
      %s21 = ssub.s32 %s16, 1
      %s22 = ssub.s32 %s16, 2
      %s29 = sadd.s32 1, %s24
      %p30 = scmp.ge.s32.totalorder %s29, 2
      %s31 = scalar_select %p30, 0, %s29
      %s32 = sadd.s32 1, %s23
      %s33 = scalar_select %p30, %s32, %s23
      %p34 = scmp.ge.s32.totalorder %s33, 1
      %s35 = scalar_select %p34, 0, %s33
      %s36 = ssub.s32 %s23, %s35
      %s37 = ssub.s32 %s24, %s31
      %s38 = sor.u32 %s36, %s37
      %p39 = scmp.eq.s32.totalorder %s38, 0
      %s41 = sadd.s32 %s40, 1
      %s42 = scalar_select %p39, %s40, %s41
      %p45 = pneg %p39
      %p46 = scmp.eq.s32.totalorder %s16, 1
      %p47 = por %p45, %p46
      %p48 = scmp.ne.s32.totalorder %s40, %s43
      %p49 = scmp.eq.s32.totalorder %s16, 0
      %p50 = por %p48, %p49
      %p51 = scmp.ne.s32.totalorder %s40, %s43
      %p52 = scmp.eq.s32.totalorder %s21, 1
      %p53 = por %p51, %p52
      %p54 = scmp.ne.s32.totalorder %s43, %s44
      %p55 = scmp.eq.s32.totalorder %s21, 0
      %p56 = por %p54, %p55
      %p57 = scmp.ne.s32.totalorder %s43, %s44
      %p58 = scmp.eq.s32.totalorder %s22, 1
      %p59 = por %p57, %p58
      %p61 = scmp.ne.s32.totalorder %s44, %s60
      %p62 = scmp.eq.s32.totalorder %s22, 0
      %p63 = por %p61, %p62
      %s64 = ssub.s32 %s24, %s31
      %p65 = scmp.eq.s32.totalorder %s64, 0
      %s67 = sadd.s32 %s66, 1
      %s68 = scalar_select %p65, %s66, %s67
      %p71 = pneg %p65
      %p72 = scmp.eq.s32.totalorder %s16, 1
      %p73 = por %p71, %p72
      %p74 = scmp.ne.s32.totalorder %s66, %s69
      %p75 = scmp.eq.s32.totalorder %s16, 0
      %p76 = por %p74, %p75
      %p77 = scmp.ne.s32.totalorder %s66, %s69
      %p78 = scmp.eq.s32.totalorder %s21, 1
      %p79 = por %p77, %p78
      %p80 = scmp.ne.s32.totalorder %s69, %s70
      %p81 = scmp.eq.s32.totalorder %s21, 0
      %p82 = por %p80, %p81
      %p83 = scmp.ne.s32.totalorder %s69, %s70
      %p84 = scmp.eq.s32.totalorder %s22, 1
      %p85 = por %p83, %p84
      %p87 = scmp.ne.s32.totalorder %s70, %s86
      %p88 = scmp.eq.s32.totalorder %s22, 0
      %p89 = por %p87, %p88
      %s90 = ssub.s32 %s23, %s35
      %p91 = scmp.eq.s32.totalorder %s90, 0
      %s93 = sadd.s32 %s92, 1
      %s94 = scalar_select %p91, %s92, %s93
      %p97 = pneg %p91
      %p98 = scmp.eq.s32.totalorder %s16, 1
      %p99 = por %p97, %p98
      %p100 = scmp.ne.s32.totalorder %s92, %s95
      %p101 = scmp.eq.s32.totalorder %s16, 0
      %p102 = por %p100, %p101
      %p103 = scmp.ne.s32.totalorder %s92, %s95
      %p104 = scmp.eq.s32.totalorder %s21, 1
      %p105 = por %p103, %p104
      %p106 = scmp.ne.s32.totalorder %s95, %s96
      %p107 = scmp.eq.s32.totalorder %s21, 0
      %p108 = por %p106, %p107
      %p109 = scmp.ne.s32.totalorder %s95, %s96
      %p110 = scmp.eq.s32.totalorder %s22, 1
      %p111 = por %p109, %p110
      %p113 = scmp.ne.s32.totalorder %s96, %s112
      %p114 = scmp.eq.s32.totalorder %s22, 0
      %p115 = por %p113, %p114
      %p116 = scmp.le.s32.totalorder 1, %s16
      %p117 = scmp.lt.s32.totalorder %s16, 3
      %p118 = pnand %p116, %p117
      %p119 = pneg %p118
      // Predicated region
      $region9: #{_level_loss_jit.1} parent=5 // pred_check
        _
      $region10: #{_level_loss_jit.1} parent=5 // pred_check_branch
        %121 = sbr.rel (%p118) target = $region12
      $region11: #{_level_loss_jit.1} parent=5 // pred_region
        %s122 = ssub.s32 %s16, 1
      $region12: #{_level_loss_jit.1} parent=5 // pred_fallthru
        _
      %p123 = scmp.lt.s32.totalorder %s16, 2
      // Predicated region
      $region13: #{_level_loss_jit.1} parent=5 // pred_check
        %p124 = pneg %p123
      $region14: #{_level_loss_jit.1} parent=5 // pred_check_branch
        %126 = sbr.rel (%p124) target = $region16
      $region15: #{_level_loss_jit.1} parent=5 // pred_region
        // Predicated region
        $region17: #{_level_loss_jit.1} parent=15 // pred_check
          %p127 = pneg %p50
        $region18: #{_level_loss_jit.1} parent=15 // pred_check_branch
          %129 = sbr.rel (%p127) target = $region20
        $region19: #{_level_loss_jit.1} parent=15 // pred_region
          %s130 = smul.u32 3, %s24
          %p131 = scmp.lt.s32.totalorder %s23, 0
          %s132 = scalar_select %p131, %s23, 0
          %p133 = scmp.lt.s32.totalorder %s130, 5
          %s134 = scalar_select %p133, %s130, 5
          %s135 = smul.addr %s132, 6
          %s136 = sadd.s32 %s134, %s135
          %s137 = smul.addr %s136, 4
          %s138 = scalar_lea.vmem %s1, %s137
          %s139 = smul.u32 3, %s24
        $region20: #{_level_loss_jit.1} parent=15 // pred_fallthru
          _
        // Predicated region
        $region21: #{_level_loss_jit.1} parent=15 // pred_check
          %p140 = pneg %p76
        $region22: #{_level_loss_jit.1} parent=15 // pred_check_branch
          %142 = sbr.rel (%p140) target = $region24
        $region23: #{_level_loss_jit.1} parent=15 // pred_region
          %s143 = smul.u32 3, %s24
          %p144 = scmp.lt.s32.totalorder %s143, 5
          %s145 = scalar_select %p144, %s143, 5
          %s146 = smul.addr %s145, 4
          %s147 = scalar_lea.vmem %s2, %s146
          %s148 = smul.u32 3, %s24
        $region24: #{_level_loss_jit.1} parent=15 // pred_fallthru
          _
      $region16: #{_level_loss_jit.1} parent=5 // pred_fallthru
        _
      %p149 = scmp.le.s32.totalorder 1, %s16
      %p150 = scmp.lt.s32.totalorder %s16, 3
      %p151 = pnand %p149, %p150
      %p152 = pneg %p151
      // Predicated region
      $region25: #{_level_loss_jit.1} parent=5 // pred_check
        _
      $region26: #{_level_loss_jit.1} parent=5 // pred_check_branch
        %154 = sbr.rel (%p151) target = $region28
      $region27: #{_level_loss_jit.1} parent=5 // pred_region
        %s155 = ssub.s32 %s16, 1
        %s156 = smul.u32 3, %s26
        %p157 = scmp.lt.s32.totalorder %s25, 0
        %s158 = scalar_select %p157, %s25, 0
        %p159 = scmp.lt.s32.totalorder %s156, 5
        %s160 = scalar_select %p159, %s156, 5
        %s161 = smul.addr %s158, 6
        %s162 = sadd.s32 %s160, %s161
        %s163 = smul.addr %s162, 4
        %s164 = scalar_lea.vmem %s1, %s163
        %p165 = pneg %p56
        %p166 = pneg %p53
        %s167 = smul.u32 3, %s26
        %p168 = scmp.lt.s32.totalorder %s167, 5
        %s169 = scalar_select %p168, %s167, 5
        %s170 = smul.addr %s169, 4
        %s171 = scalar_lea.vmem %s2, %s170
        %p172 = pneg %p82
        %p173 = pneg %p79
        %p174 = pneg %p108
        %p175 = pneg %p105
        %s176 = smul.u32 3, %s26
        %p177 = scmp.lt.s32.totalorder %s25, 0
        %s178 = scalar_select %p177, %s25, 0
        %p179 = scmp.lt.s32.totalorder %s176, 5
        %s180 = scalar_select %p179, %s176, 5
        %s181 = smul.addr %s178, 6
        %s182 = sadd.s32 %s180, %s181
        %s183 = smul.addr %s182, 4
        %s184 = scalar_lea.vmem %s1, %s183
        %s185 = smul.u32 3, %s26
        %s186 = smul.u32 3, %s26
        %p187 = scmp.lt.s32.totalorder %s186, 5
        %s188 = scalar_select %p187, %s186, 5
        %s189 = smul.addr %s188, 4
        %s190 = scalar_lea.vmem %s2, %s189
        %s191 = smul.u32 3, %s26
        %s193 = sld [smem:[#allocation6]]
        %s194 = sld [smem:[#allocation6 + $0x1]]
        %p195 = scmp.eq.s32.totalorder %s26, 0
        // Predicated region
        $region29: #{_level_loss_jit.1} parent=27 // pred_check
          %p196 = pneg %p195
        $region30: #{_level_loss_jit.1} parent=27 // pred_check_branch
          %198 = sbr.rel (%p196) target = $region32
        $region31: #{_level_loss_jit.1} parent=27 // pred_region
          %vm199 = vcmask 64512
          %200 = vst.msk [vmem:[#allocation2] sm:$0xff] %vm199, 0.0
          %vm201 = vcmask 7168
          %202 = vst.msk [vmem:[#allocation3] sm:$0xff] %vm201, 0.0
          %v203 = vlaneseq
          %v204 = vshrl.u32 %v203, 7
          %v205 = vstv %s194
          %vm206 = vcmp.lt.s32.totalorder %v204, %v205
          %v207 = vsel %vm206, 0.0, 1e+30
          %208 = vst.msk [vmem:[#allocation4] sm:$0xff] %vm201, %v207
        $region32: #{_level_loss_jit.1} parent=27 // pred_fallthru
          _
        %v209 = vld [vmem:[%s184] sm:$0xff]
        %v210 = vld [vmem:[%s184 + $0x8] sm:$0xf]
        %v211 = vld [vmem:[%s190] sm:$0xff]
        %v212 = vld [vmem:[%s190 + $0x8] sm:$0xf]
        %v213 = vunpack.c.l.bf16 %v209
        %v214 = vunpack.c.h.bf16 %v209
        %v215 = vunpack.c.l.bf16 %v210
        %v216 = vunpack.c.l.bf16 %v211
        %v217 = vunpack.c.h.bf16 %v211
        %v218 = vunpack.c.l.bf16 %v212
        %v219 = vld [vmem:[#allocation3] sm:$0xff]
        %v220 = vmul.f32 %v213, %v213
        %v221 = vmul.f32 %v214, %v214
        %v222 = vmul.f32 %v215, %v215
        %v223 = vadd.f32 %v220, %v221
        %v224 = vadd.f32 %v223, %v222
        %225 = vadd.xlane.f32.xlu0 %v224
        %v226 = vpop.xlane.xlu0 %225
        %v227 = vadd.f32 %v219, %v226
        %vm228 = vcmask 7168
        %229 = vst.msk [vmem:[#allocation3] sm:$0xff] %vm228, %v227
        %v230 = vld [vmem:[#allocation4] sm:$0xff]
        %v231 = vmul.f32 %v216, %v216
        %v232 = vmul.f32 %v217, %v217
        %v233 = vmul.f32 %v218, %v218
        %v234 = vadd.f32 %v231, %v232
        %v235 = vadd.f32 %v234, %v233
        %236 = vadd.xlane.f32.xlu0 %v235
        %v237 = vpop.xlane.xlu0 %236
        %v238 = vadd.f32 %v230, %v237
        %239 = vst.msk [vmem:[#allocation4] sm:$0xff] %vm228, %v238
        %v240 = vld [vmem:[#allocation2] sm:$0xff]
        %v243 = vunpack.c.l.b16 %v209
        %v244 = vunpack.c.h.b16 %v209
        %v245 = vunpack.c.l.b16 %v210
        %v246 = vpack.c.b16 %v243, %v243
        %v247 = vpack.c.b16 %v244, %v244
        %v248 = vpack.c.b16 %v245, %v245
        %v254 = vunpack.c.l.b16 %v211
        %v255 = vunpack.c.h.b16 %v211
        %v256 = vunpack.c.l.b16 %v212
        %v257 = vpack.c.b16 %v254, %v254
        %v258 = vpack.c.b16 %v255, %v255
        %v259 = vpack.c.b16 %v256, %v256
        %263 = vmatprep.subr.bf16.mxu0 0
        %264 = vmatpush1.bf16.xpose.msra.mxu0 0
        %265 = vmatprep.subr.bf16.mxu0 0
        %266 = vmatpush1.bf16.xpose.msra.mxu0 0
        %267 = vmatprep.subr.bf16.mxu0 0
        %268 = vmatpush1.bf16.xpose.msra.mxu0 0
        %269 = vmatprep.subr.bf16.mxu0 0
        %270 = vmatpush1.bf16.xpose.msra.mxu0 0
        %271 = vmatprep.subr.bf16.mxu0 0
        %272 = vmatpush1.bf16.xpose.msra.mxu0 0
        %273 = vmatprep.subr.bf16.mxu0 0
        %274 = vmatpush1.bf16.xpose.msra.mxu0 0
        %275 = vmatprep.subr.bf16.mxu0 0
        %276 = vmatpush1.bf16.xpose.msra.mxu0 0
        %277 = vmatprep.subr.bf16.mxu0 %v258
        %278 = vmatpush1.bf16.xpose.msra.mxu0 %v257
        %279 = vmatprep.subr.bf16.mxu0 0
        %280 = vmatpush2.bf16.xpose.msra.mxu0 0
        %281 = vmatprep.subr.bf16.mxu0 0
        %282 = vmatpush2.bf16.xpose.msra.mxu0 0
        %283 = vmatprep.subr.bf16.mxu0 0
        %284 = vmatpush2.bf16.xpose.msra.mxu0 0
        %285 = vmatprep.subr.bf16.mxu0 0
        %286 = vmatpush2.bf16.xpose.msra.mxu0 0
        %287 = vmatprep.subr.bf16.mxu0 0
        %288 = vmatpush2.bf16.xpose.msra.mxu0 0
        %289 = vmatprep.subr.bf16.mxu0 0
        %290 = vmatpush2.bf16.xpose.msra.mxu0 0
        %291 = vmatprep.subr.bf16.mxu0 0
        %292 = vmatpush2.bf16.xpose.msra.mxu0 0
        %293 = vmatprep.subr.bf16.mxu0 0
        %294 = vmatpush2.bf16.xpose.msra.mxu0 0
        %295 = vmatprep.mubr.bf16.mxu0 %v247
        %296 = vmatmul.mubr.bf16.gmra.mxu0 %v246
        %v297 = vpop.f32.mrf.mxu0
        %v298 = vadd.f32 0.0, %v297
        %v299 = vpop.f32.mrf.mxu0
        %v300 = vpop.f32.mrf.mxu0
        %v301 = vpop.f32.mrf.mxu0
        %302 = vdwg.mxu0
        %303 = vmatprep.subr.bf16.mxu0 0
        %304 = vmatpush1.bf16.xpose.msra.mxu0 0
        %305 = vmatprep.subr.bf16.mxu0 0
        %306 = vmatpush1.bf16.xpose.msra.mxu0 0
        %307 = vmatprep.subr.bf16.mxu0 0
        %308 = vmatpush1.bf16.xpose.msra.mxu0 0
        %309 = vmatprep.subr.bf16.mxu0 0
        %310 = vmatpush1.bf16.xpose.msra.mxu0 0
        %311 = vmatprep.subr.bf16.mxu0 0
        %312 = vmatpush1.bf16.xpose.msra.mxu0 0
        %313 = vmatprep.subr.bf16.mxu0 0
        %314 = vmatpush1.bf16.xpose.msra.mxu0 0
        %315 = vmatprep.subr.bf16.mxu0 0
        %316 = vmatpush1.bf16.xpose.msra.mxu0 0
        %317 = vmatprep.subr.bf16.mxu0 0
        %318 = vmatpush1.bf16.xpose.msra.mxu0 %v259
        %319 = vmatprep.subr.bf16.mxu0 0
        %320 = vmatpush2.bf16.xpose.msra.mxu0 0
        %321 = vmatprep.subr.bf16.mxu0 0
        %322 = vmatpush2.bf16.xpose.msra.mxu0 0
        %323 = vmatprep.subr.bf16.mxu0 0
        %324 = vmatpush2.bf16.xpose.msra.mxu0 0
        %325 = vmatprep.subr.bf16.mxu0 0
        %326 = vmatpush2.bf16.xpose.msra.mxu0 0
        %327 = vmatprep.subr.bf16.mxu0 0
        %328 = vmatpush2.bf16.xpose.msra.mxu0 0
        %329 = vmatprep.subr.bf16.mxu0 0
        %330 = vmatpush2.bf16.xpose.msra.mxu0 0
        %331 = vmatprep.subr.bf16.mxu0 0
        %332 = vmatpush2.bf16.xpose.msra.mxu0 0
        %333 = vmatprep.subr.bf16.mxu0 0
        %334 = vmatpush2.bf16.xpose.msra.mxu0 0
        %335 = vmatprep.mubr.bf16.mxu0 0
        %336 = vmatmul.mubr.bf16.gmra.mxu0 %v248
        %v337 = vpop.f32.mrf.mxu0
        %v338 = vadd.f32 %v298, %v337
        %v339 = vpop.f32.mrf.mxu0
        %v340 = vpop.f32.mrf.mxu0
        %v341 = vpop.f32.mrf.mxu0
        %342 = vdwg.mxu0
        %v343 = vadd.f32 %v240, %v338
        %vm344 = vcmask 64512
        %345 = vst.msk [vmem:[#allocation2] sm:$0xff] %vm344, %v343
        %p346 = scmp.eq.s32.totalorder %s26, 1
        // Predicated region
        $region33: #{_level_loss_jit.1} parent=27 // pred_check
          %p347 = pneg %p346
        $region34: #{_level_loss_jit.1} parent=27 // pred_check_branch
          %349 = sbr.rel (%p347) target = $region36
        $region35: #{_level_loss_jit.1} parent=27 // pred_region
          %v350 = vld [vmem:[#allocation2] sm:$0xff]
          %v351 = vld [vmem:[#allocation3] sm:$0xff]
          %v352 = vld [vmem:[#allocation4] sm:$0xff]
          %353 = vxpose.xlu0.b32.start [1/16] %v352, 128
          %354 = vxpose.xlu0.b32.cont [2/16] 0.0, 128
          %355 = vxpose.xlu0.b32.cont [3/16] 0.0, 128
          %356 = vxpose.xlu0.b32.cont [4/16] 0.0, 128
          %357 = vxpose.xlu0.b32.cont [5/16] 0.0, 128
          %358 = vxpose.xlu0.b32.cont [6/16] 0.0, 128
          %359 = vxpose.xlu0.b32.cont [7/16] 0.0, 128
          %360 = vxpose.xlu0.b32.cont [8/16] 0.0, 128
          %361 = vxpose.xlu0.b32.cont [9/16] 0.0, 128
          %362 = vxpose.xlu0.b32.cont [10/16] 0.0, 128
          %363 = vxpose.xlu0.b32.cont [11/16] 0.0, 128
          %364 = vxpose.xlu0.b32.cont [12/16] 0.0, 128
          %365 = vxpose.xlu0.b32.cont [13/16] 0.0, 128
          %366 = vxpose.xlu0.b32.cont [14/16] 0.0, 128
          %367 = vxpose.xlu0.b32.cont [15/16] 0.0, 128
          %368 = vxpose.xlu0.b32.end [16/16] 0.0, 128
          %v369 = vpop.trf.xlu0
          %v370 = vpop.trf.xlu0
          %v371 = vpop.trf.xlu0
          %v372 = vpop.trf.xlu0
          %v373 = vpop.trf.xlu0
          %v374 = vpop.trf.xlu0
          %v375 = vpop.trf.xlu0
          %v376 = vpop.trf.xlu0
          %v377 = vpop.trf.xlu0
          %v378 = vpop.trf.xlu0
          %v379 = vpop.trf.xlu0
          %v380 = vpop.trf.xlu0
          %v381 = vpop.trf.xlu0
          %v382 = vpop.trf.xlu0
          %v383 = vpop.trf.xlu0
          %v384 = vpop.trf.xlu0
          %386 = vset.pattern.permute.xlu0 0
          %387 = vperm.xlu0 %386, %v351
          %v388 = vpop.permute.xlu0 %387
          %v390 = vlaneseq
          %v391 = vshrl.u32 %v390, 7
          %v392 = vsub.s32 0, %v391
          %v393 = vrot.slane %v369, %v392
          %v394 = vadd.f32 %v388, %v393
          %v395 = vmul.f32 %v350, 2.0
          %v396 = vsub.f32 %v394, %v395
          %v397 = vmax.f32 %v396, 0.0
          %v398 = vrsqrt.pop %v397
          %v399 = vmul.f32 %v397, %v398
          %vm400 = vcmp.eq.f32.partialorder %v397, inf
          %v401 = vsel %vm400, %v397, %v399
          %vm402 = vcmp.eq.f32.partialorder %v397, 0.0
          %v403 = vand.u32 %v397, 2147483648
          %v404 = vsel %vm402, %v403, %v401
          %v405 = vsel %vm344, %v404, inf
          %406 = vmin.xlane.f32.xlu0 %v405
          %v407 = vpop.xlane.xlu0 %406
          %v408 = vsub.f32 1.0, %v404
          %v409 = vmax.f32 %v408, 0.0
          %vm410 = vcmp.ne.f32.partialorder %v404, %v407
          %v411 = vsel %vm410, %v409, 0.0
          %v412 = vsel %vm344, %v411, 0.0
          %413 = vadd.xlane.f32.xlu0 %v412
          %v414 = vpop.xlane.xlu0 %413
          %v415 = vlaneseq
          %v416 = vshrl.u32 %v415, 7
          %s417 = smul.u32 %s25, 8
          %v418 = vstv %s417
          %v419 = vadd.s32 %v416, %v418
          %v420 = vstv %s193
          %vm421 = vcmp.lt.s32.totalorder %v419, %v420
          %v422 = vadd.f32 %v407, %v414
          %v423 = vsel %vm421, %v422, 0.0
          %v424 = vsel %vm228, %v423, 0.0
          %425 = vadd.xlane.f32.xlu0 %v424
          %v426 = vpop.xlane.xlu0 %425
          %v427 = vrot.slane %v426, 4
          %v428 = vadd.f32 %v426, %v427
          %v429 = vrot.slane %v428, 2
          %v430 = vadd.f32 %v428, %v429
          %v431 = vrot.slane %v430, 1
          %v432 = vadd.f32 %v430, %v431
          %s433 = vtos %v432
          %v434 = vstv %s433
          %vm435 = vcmask 0
          %436 = vst.msk [vmem:[#allocation7] sm:$0x1] %vm435, %v434
        $region36: #{_level_loss_jit.1} parent=27 // pred_fallthru
          _
        // Predicated region
        $region37: #{_level_loss_jit.1} parent=27 // pred_check
          %p437 = pneg %p105
        $region38: #{_level_loss_jit.1} parent=27 // pred_check_branch
          %439 = sbr.rel (%p437) target = $region40
        $region39: #{_level_loss_jit.1} parent=27 // pred_region
          %s441 = ssub.s32 16, 16
          %442 = vsyncadd [#allocation8], %s441
          %s443 = smul.addr %s25, 16
          %s444 = scalar_lea.hbm %s3, %s443
          %s446 = sshll.u32 [#allocation7], 4
          %s447 = int_to_ptr.vmem [resolvable:$true] %s446
          %449 = dma.vmem_to_hbm [thread:$0]  %s447, 16, %s444, [#allocation8]
        $region40: #{_level_loss_jit.1} parent=27 // pred_fallthru
          _
        // Predicated region
        $region41: #{_level_loss_jit.1} parent=27 // pred_check
          %p450 = pneg %p105
        $region42: #{_level_loss_jit.1} parent=27 // pred_check_branch
          %452 = sbr.rel (%p450) target = $region44
        $region43: #{_level_loss_jit.1} parent=27 // pred_region
          %453 = dma.done [#allocation8], 16
        $region44: #{_level_loss_jit.1} parent=27 // pred_fallthru
          _
      $region28: #{_level_loss_jit.1} parent=5 // pred_fallthru
        _
      %p454 = scmp.le.s32.totalorder 2, %s16
      // Predicated region
      $region45: #{_level_loss_jit.1} parent=5 // pred_check
        %p455 = pneg %p454
      $region46: #{_level_loss_jit.1} parent=5 // pred_check_branch
        %457 = sbr.rel (%p455) target = $region48
      $region47: #{_level_loss_jit.1} parent=5 // pred_region
        %s458 = ssub.s32 %s16, 2
      $region48: #{_level_loss_jit.1} parent=5 // pred_fallthru
        _
    $region6: #{_level_loss_jit.1} parent=1 // loop_footer
      %s20 = sadd.s32 1, %s16
    $region7: #{_level_loss_jit.1} parent=1 // loop_footer_branch
      %15 = sbr.rel target = $region3
    $region8: #{_level_loss_jit.1} parent=1 // loop_exit
      _
    %459 = vsyncpa [#allocation8], 1
    %s460 = scalar_lea.sflag [#allocation8], 1
    %461 = vsyncpa %s460, 1

</llo_original>
